<compile_context>
chip_gen: v7x
topology: tpu7x:2x2x1
jax: 0.10.0
libtpu: 0.0.40
codegen_flags: <defaults>
</compile_context>

<pallas_src>
import functools

import jax
import jax.numpy as jnp
from jax.experimental import pallas as pl
from jax.experimental.pallas import tpu as pltpu


# Per-image (c, hw) slab threshold (f32-equivalent bytes) for the fused single-pass
# variant.  Double-buffered in + out blocks plus an f32 temp stays ~10-12 MiB of VMEM,
# under the default scoped limit on v5e (16 MiB), v6e (32 MiB) and v7x (32 MiB).
_FUSED_SLAB_BYTES = 2 * 1024 * 1024
# Per-block budget for the streaming two-pass path: pass 2 pipelines ~4 blocks
# (in + out, double-buffered) -> <= 12 MiB, safe on every generation's default limit.
_STREAM_BLOCK_BYTES = 3 * 1024 * 1024


def _round_up(x, m):
    return ((x + m - 1) // m) * m


def _pick_tiles(n_rows, hw, itemsize):
    """Pick (row_tile, lane_tile) for the streaming path on a (n_rows, hw) layout."""
    # Lane tile: large (>= 512 whenever hw allows), multiple of 128, independent of
    # divisibility — ragged tails use cdiv grids + masking, never a tiny tile.
    t = min(2048, _round_up(hw, 128))
    # Row tile: native sublane multiple for the dtype (8 f32 / 16 bf16 / 32 int8),
    # bounded by the per-block VMEM budget, and capped at ~half the rows so the pooling
    # pass gets >= 2 "parallel" row blocks (both v7x TensorCores even at batch 1).
    sub = max(8, 32 // itemsize)
    if n_rows <= sub:
        return n_rows, t                       # full-extent row block (always legal)
    r_budget = max(sub, (_STREAM_BLOCK_BYTES // (t * itemsize)) // sub * sub)
    r_half = _round_up((n_rows + 1) // 2, sub)
    return max(sub, min(r_budget, r_half)), t


# ----------------------------- fused single-pass kernel -----------------------------
def _fused_eca_kernel(w_ref, x_ref, o_ref, *, c, hw, rate):
    """Whole-image fusion: global avg pool -> dilated 3-tap conv -> sigmoid -> x*scale."""
    x = x_ref[0]                                                        # (c, hw), x.dtype
    pooled = jnp.sum(x.astype(jnp.float32), axis=-1, keepdims=True) * (1.0 / hw)  # (c, 1)
    zpad = jnp.zeros((rate, 1), jnp.float32)
    p = jnp.concatenate([zpad, pooled, zpad], axis=0)                   # (c + 2*rate, 1)
    y = (w_ref[0] * p[0:c, :]
         + w_ref[1] * p[rate:rate + c, :]
         + w_ref[2] * p[2 * rate:2 * rate + c, :])                      # (c, 1) f32
    scale = jax.nn.sigmoid(y).astype(x.dtype)
    o_ref[0] = x * scale                                                # broadcast over hw


# ----------------------------- streaming two-pass kernels ---------------------------
def _pool_sum_kernel(x_ref, sum_ref, *, hw, t, need_mask):
    """Accumulate the spatial sum of one (R, t) tile into the resident (R, 1) f32 block."""
    ti = pl.program_id(1)

    @pl.when(ti == 0)
    def _init():
        sum_ref[...] = jnp.zeros_like(sum_ref)

    x = x_ref[...].astype(jnp.float32)                                  # (R, t)
    if need_mask:  # static: only emitted when hw % t != 0 (ragged lane tail)
        lane = jax.lax.broadcasted_iota(jnp.int32, x.shape, 1) + ti * t
        x = jnp.where(lane < hw, x, 0.0)
    sum_ref[...] += jnp.sum(x, axis=-1, keepdims=True)


def _scale_mul_kernel(s_ref, x_ref, o_ref):
    """out = x * per-row scale (broadcast along the lane / spatial axis), in x.dtype."""
    o_ref[...] = x_ref[...] * s_ref[...]


# ----------------------------------- wrapper ----------------------------------------
def dilated_eca_forward(x, conv_weight, rate, *, force_path=None):
    """Forward of _dailted_eca_layer.

    x: (b, c, h, w); conv_weight: the 3 taps of Conv1d(1,1,3,dilation=rate,padding=rate,
    bias=False) (any shape with 3 elements); rate: dilation.  force_path in
    {None, "fused", "two_pass"} (testing knob).
    """
    b, c, h, w = x.shape
    hw = h * w
    itemsize = jnp.dtype(x.dtype).itemsize
    wf = jnp.asarray(conv_weight, jnp.float32).reshape(-1)

    use_fused = c * hw * 4 <= _FUSED_SLAB_BYTES
    if force_path == "fused":
        use_fused = True
    elif force_path == "two_pass":
        use_fused = False

    if use_fused:
        # ---- single pass over HBM: read x once, write out once ----------------------
        x3 = x.reshape(b, c, hw)                         # contiguous reshape: no copy
        kern = functools.partial(_fused_eca_kernel, c=c, hw=hw, rate=rate)
        out = pl.pallas_call(
            kern,
            out_shape=jax.ShapeDtypeStruct((b, c, hw), x.dtype),
            grid_spec=pltpu.PrefetchScalarGridSpec(
                num_scalar_prefetch=0,
                grid=(b,),
                in_specs=[
                    pl.BlockSpec(memory_space=pltpu.MemorySpace.SMEM),   # 3 conv taps
                    pl.BlockSpec((1, c, hw), lambda bi: (bi, 0, 0)),
                ],
                out_specs=pl.BlockSpec((1, c, hw), lambda bi: (bi, 0, 0)),
            ),
            compiler_params=pltpu.CompilerParams(
                dimension_semantics=("parallel",)),
            cost_estimate=pl.CostEstimate(
                flops=2 * b * c * hw + 6 * b * c,
                transcendentals=b * c,
                bytes_accessed=2 * b * c * hw * itemsize + 12),
        )(wf, x3)
        return out.reshape(b, c, h, w)

    # ---- streaming two-pass path (per-image slab too big for VMEM residency) --------
    n_rows = b * c
    x2 = x.reshape(n_rows, hw)                           # contiguous reshape: no copy
    rt, t = _pick_tiles(n_rows, hw, itemsize)
    n_r = pl.cdiv(n_rows, rt)
    n_t = pl.cdiv(hw, t)

    # Pass 1: tiled global-average-pool reduction (f32 accumulator resident per row block).
    pooled_sum = pl.pallas_call(
        functools.partial(_pool_sum_kernel, hw=hw, t=t, need_mask=(hw % t != 0)),
        out_shape=jax.ShapeDtypeStruct((n_rows, 1), jnp.float32),
        grid_spec=pltpu.PrefetchScalarGridSpec(
            num_scalar_prefetch=0,
            grid=(n_r, n_t),
            in_specs=[pl.BlockSpec((rt, t), lambda ri, ti: (ri, ti))],
            out_specs=pl.BlockSpec((rt, 1), lambda ri, ti: (ri, 0)),
        ),
        compiler_params=pltpu.CompilerParams(
            dimension_semantics=("parallel", "arbitrary")),
        cost_estimate=pl.CostEstimate(
            flops=n_rows * hw, transcendentals=0,
            bytes_accessed=n_rows * hw * itemsize + n_rows * 4),
    )(x2)

    # Tiny O(b*c) per-channel epilogue in XLA: mean, dilated 3-tap conv, sigmoid.
    pooled = pooled_sum.reshape(b, c) * (1.0 / hw)
    padded = jnp.pad(pooled, ((0, 0), (rate, rate)))
    y = (wf[0] * padded[:, 0:c]
         + wf[1] * padded[:, rate:rate + c]
         + wf[2] * padded[:, 2 * rate:2 * rate + c])
    scale = jax.nn.sigmoid(y).astype(x.dtype).reshape(n_rows, 1)

    # Pass 2: streaming broadcast multiply, both grid axes parallel.
    out = pl.pallas_call(
        _scale_mul_kernel,
        out_shape=jax.ShapeDtypeStruct((n_rows, hw), x.dtype),
        grid_spec=pltpu.PrefetchScalarGridSpec(
            num_scalar_prefetch=0,
            grid=(n_r, n_t),
            in_specs=[pl.BlockSpec((rt, 1), lambda ri, ti: (ri, 0)),
                      pl.BlockSpec((rt, t), lambda ri, ti: (ri, ti))],
            out_specs=pl.BlockSpec((rt, t), lambda ri, ti: (ri, ti)),
        ),
        compiler_params=pltpu.CompilerParams(
            dimension_semantics=("parallel", "parallel")),
        cost_estimate=pl.CostEstimate(
            flops=n_rows * hw, transcendentals=0,
            bytes_accessed=2 * n_rows * hw * itemsize + n_rows * itemsize),
    )(scale, x2)
    return out.reshape(b, c, h, w)


def dilated_eca_reference(x, conv_weight, rate):
    """Pure-JAX reference matching the PyTorch forward exactly."""
    b, c, h, w = x.shape
    pooled = jnp.mean(x.astype(jnp.float32), axis=(2, 3))               # (b, c)
    wf = jnp.asarray(conv_weight, jnp.float32).reshape(-1)
    padded = jnp.pad(pooled, ((0, 0), (rate, rate)))
    y = (wf[0] * padded[:, 0:c]
         + wf[1] * padded[:, rate:rate + c]
         + wf[2] * padded[:, 2 * rate:2 * rate + c])
    s = jax.nn.sigmoid(y)
    return (x.astype(jnp.float32) * s[:, :, None, None]).astype(x.dtype)


if __name__ == "__main__":
    key = jax.random.PRNGKey(0)
    k1, k2, k3, k4, kw = jax.random.split(key, 5)

    # Stand-in for Conv1d(1, 1, 3, dilation=r, padding=r, bias=False).weight  (1, 1, 3)
    conv_weight = jax.random.normal(kw, (1, 1, 3), dtype=jnp.float32) * 0.5

    # Case 1: fused single-pass path (slab fits VMEM), hw a multiple of 128.
    x1 = jax.random.normal(k1, (2, 8, 16, 16), dtype=jnp.float32)
    o1 = dilated_eca_forward(x1, conv_weight, rate=2)
    jax.block_until_ready(o1)
    r1 = dilated_eca_reference(x1, conv_weight, 2)
    assert o1.shape == x1.shape
    assert jnp.allclose(o1, r1, atol=1e-5, rtol=1e-4), "case 1 (fused) mismatch"

    # Case 2: streaming path, ragged hw (20x20) + partial row block (b*c=20, R=16).
    x2 = jax.random.normal(k2, (2, 10, 20, 20), dtype=jnp.float32)
    o2 = dilated_eca_forward(x2, conv_weight, rate=3, force_path="two_pass")
    jax.block_until_ready(o2)
    r2 = dilated_eca_reference(x2, conv_weight, 3)
    assert jnp.allclose(o2, r2, atol=1e-5, rtol=1e-4), "case 2 (two-pass ragged) mismatch"

    # Case 3: streaming path, multi-tile ragged lane axis (48x48=2304 -> t=2048, n_t=2).
    x3 = jax.random.normal(k3, (1, 16, 48, 48), dtype=jnp.float32)
    o3 = dilated_eca_forward(x3, conv_weight, rate=1, force_path="two_pass")
    jax.block_until_ready(o3)
    r3 = dilated_eca_reference(x3, conv_weight, 1)
    assert jnp.allclose(o3, r3, atol=1e-5, rtol=1e-4), "case 3 (two-pass multi-tile) mismatch"

    # Case 4: bf16 activations, fused path (multiply in bf16, pooled sum in f32).
    x4 = jax.random.normal(k4, (1, 8, 16, 16), dtype=jnp.float32).astype(jnp.bfloat16)
    o4 = dilated_eca_forward(x4, conv_weight, rate=1)
    jax.block_until_ready(o4)
    r4 = dilated_eca_reference(x4, conv_weight, 1)
    assert jnp.allclose(o4.astype(jnp.float32), r4.astype(jnp.float32),
                        atol=2e-2, rtol=2e-2), "case 4 (bf16 fused) mismatch"

    print("KERNEL_OK")
</pallas_src>

<mosaic_0001>
module attributes {stable_mosaic.version = 11 : i64} {
  func.func @_fused_eca_kernel(%arg0: i32, %arg1: memref<3xf32, #tpu.memory_space<smem>>, %arg2: memref<1x8x256xf32, #tpu.memory_space<vmem>>, %arg3: memref<1x8x256xf32, #tpu.memory_space<vmem>>) attributes {dimension_semantics = [#tpu.dimension_semantics<parallel>], iteration_bounds = array<i64: 2>, scalar_prefetch = 0 : i64, scratch_operands = 0 : i64, tpu.core_type = #tpu.core_type<tc>, window_params = [{transform_indices = @transform_0, window_bounds = array<i64: 3>}, {transform_indices = @transform_1, window_bounds = array<i64: 1, 8, 256>}, {transform_indices = @transform_2, window_bounds = array<i64: 1, 8, 256>}]} {
    %c0 = arith.constant 0 : index
    %c0_0 = arith.constant 0 : index
    %c0_1 = arith.constant 0 : index
    %0 = vector.load %arg2[%c0, %c0_0, %c0_1] : memref<1x8x256xf32, #tpu.memory_space<vmem>>, vector<1x8x256xf32>
    %1 = vector.shape_cast %0 : vector<1x8x256xf32> to vector<8x256xf32>
    %cst = arith.constant dense<0.000000e+00> : vector<8xf32>
    %2 = vector.multi_reduction <add>, %1, %cst [1] : vector<8x256xf32> to vector<8xf32>
    %3 = vector.shape_cast %2 : vector<8xf32> to vector<8x1xf32>
    %cst_2 = arith.constant 3.906250e-03 : f32
    %4 = vector.broadcast %cst_2 : f32 to vector<8x1xf32>
    %5 = arith.mulf %3, %4 : vector<8x1xf32>
    %cst_3 = arith.constant 0.000000e+00 : f32
    %6 = vector.broadcast %cst_3 : f32 to vector<2x1xf32>
    %7 = tpu.concatenate %6, %5, %6 in 0 : vector<2x1xf32>, vector<8x1xf32>, vector<2x1xf32> -> vector<12x1xf32>
    %c0_4 = arith.constant 0 : index
    %8 = memref.load %arg1[%c0_4] : memref<3xf32, #tpu.memory_space<smem>>
    %9 = vector.extract_strided_slice %7 {offsets = [0, 0], sizes = [8, 1], strides = [1, 1]} : vector<12x1xf32> to vector<8x1xf32>
    %10 = vector.broadcast %8 : f32 to vector<8x1xf32>
    %11 = arith.mulf %10, %9 : vector<8x1xf32>
    %c1 = arith.constant 1 : index
    %12 = memref.load %arg1[%c1] : memref<3xf32, #tpu.memory_space<smem>>
    %13 = vector.extract_strided_slice %7 {offsets = [2, 0], sizes = [8, 1], strides = [1, 1]} : vector<12x1xf32> to vector<8x1xf32>
    %14 = vector.broadcast %12 : f32 to vector<8x1xf32>
    %15 = arith.mulf %14, %13 : vector<8x1xf32>
    %16 = arith.addf %11, %15 : vector<8x1xf32>
    %c2 = arith.constant 2 : index
    %17 = memref.load %arg1[%c2] : memref<3xf32, #tpu.memory_space<smem>>
    %18 = vector.extract_strided_slice %7 {offsets = [4, 0], sizes = [8, 1], strides = [1, 1]} : vector<12x1xf32> to vector<8x1xf32>
    %19 = vector.broadcast %17 : f32 to vector<8x1xf32>
    %20 = arith.mulf %19, %18 : vector<8x1xf32>
    %21 = arith.addf %16, %20 : vector<8x1xf32>
    %22 = arith.negf %21 : vector<8x1xf32>
    %23 = math.exp %22 : vector<8x1xf32>
    %cst_5 = arith.constant 1.000000e+00 : f32
    %24 = vector.broadcast %cst_5 : f32 to vector<8x1xf32>
    %25 = arith.addf %24, %23 : vector<8x1xf32>
    %26 = arith.divf %24, %25 : vector<8x1xf32>
    %27 = vector.broadcast %26 : vector<8x1xf32> to vector<8x256xf32>
    %28 = arith.mulf %1, %27 : vector<8x256xf32>
    %c0_6 = arith.constant 0 : index
    %c0_7 = arith.constant 0 : index
    %c0_8 = arith.constant 0 : index
    %29 = vector.load %arg3[%c0_6, %c0_7, %c0_8] : memref<1x8x256xf32, #tpu.memory_space<vmem>>, vector<1x8x256xf32>
    %30 = vector.shape_cast %29 : vector<1x8x256xf32> to vector<8x256xf32>
    %31 = vector.shape_cast %28 : vector<8x256xf32> to vector<1x8x256xf32>
    tpu.vector_store %arg3[%c0_6, %c0_7, %c0_8], %31 {strides = array<i32>} : memref<1x8x256xf32, #tpu.memory_space<vmem>>, vector<1x8x256xf32>,
    return
  }
  func.func @transform_0(%arg0: i32) -> i32 {
    %c0_i32 = arith.constant 0 : i32
    %c0_i32_0 = arith.constant 0 : i32
    return %c0_i32 : i32
  }
  func.func @transform_1(%arg0: i32) -> (i32, i32, i32) {
    %c0_i32 = arith.constant 0 : i32
    %c0_i32_0 = arith.constant 0 : i32
    %c0_i32_1 = arith.constant 0 : i32
    return %arg0, %c0_i32, %c0_i32_0 : i32, i32, i32
  }
  func.func @transform_2(%arg0: i32) -> (i32, i32, i32) {
    %c0_i32 = arith.constant 0 : i32
    %c0_i32_0 = arith.constant 0 : i32
    %c0_i32_1 = arith.constant 0 : i32
    return %arg0, %c0_i32, %c0_i32_0 : i32, i32, i32
  }
}

</mosaic_0001>

<llo_original>
// kernel: tpu_custom_call.1
$region0: #{tpu_custom_call.1}
  #allocation0 [shape = 'u32[]', space=smem, size = 0x4, offset = 0x4, fixed_abs, tag = 'smem constant byte address 0x4 - core index']
  #allocation1 [shape = 'u32[144,128]{1,0:T(1,128)}', space=vmem, size = 0x12000, scoped, tag = 'internal scratch']
  %s0 = inlined_call_operand.hbm [shape: f32[3], index: 0, kind: input, shape index: {}]
  %s1 = inlined_call_operand.hbm [shape: f32[2,8,256], index: 1, kind: input, shape index: {}]
  %s2 = inlined_call_operand.hbm [shape: f32[2,8,256], index: 2, kind: output, shape index: {}]
  %s3 = sld [smem:[#allocation0]]
  $region49: #{tpu_custom_call.1} parent=0
    _
  %s5 = ssub.s32 1, %s3
  %s6 = scalar_select 0, %s5, %s3
  $region1: #{tpu_custom_call.1} parent=0
    #allocation2 [shape = 'u8[512]{0}', space=smem, size = 0x200, scoped, tag = 'input window, operand 0, single buffered']
    #allocation3 [shape = 's32[2]{0}', space=sflag, size = 0x8, scoped, tag = 'scoped memory for tpu_custom_call.1']
    #allocation4 [shape = 's32[2]{0}', space=sflag, size = 0x8, scoped, tag = 'scoped memory for tpu_custom_call.1']
    #allocation5 [shape = 's32[2]{0}', space=sflag, size = 0x8, scoped, tag = 'scoped memory for tpu_custom_call.1']
    #allocation6 [shape = 'u8[16384]{0}', space=vmem, size = 0x4000, scoped, tag = 'input window, operand 1']
    #allocation7 [shape = 'u8[16384]{0}', space=vmem, size = 0x4000, scoped, tag = 'output window, operand 0']
    %7 = vsyncpa [#allocation5], 0
    %8 = vsyncpa [#allocation3], 0
    %s9 = scalar_lea.sflag [#allocation3], 1
    %10 = vsyncpa %s9, 0
    %11 = vsyncpa [#allocation4], 0
    %s12 = scalar_lea.sflag [#allocation4], 1
    %13 = vsyncpa %s12, 0
    loop: start=0, step=1, limit=4
    $region2: #{tpu_custom_call.1} parent=1 // loop_pre_header
      _
    $region3: #{tpu_custom_call.1} parent=1 // loop_header
      %s15 = sphi 0, %s19
      %p16 = scmp.ge.s32.totalorder %s15, 4
      %s23 = sphi 0, %s23
      %s25 = sphi 0, %s23
      %s26 = sphi 0, %s25
      %s40 = sphi 0, %s26
      %s46 = sphi 0, %s48
      %s49 = sphi 0, %s46
      %s50 = sphi 0, %s49
      %s66 = sphi 0, %s50
      %s72 = sphi 0, %s74
      %s75 = sphi 0, %s72
      %s76 = sphi 0, %s75
      %s92 = sphi 0, %s76
    $region4: #{tpu_custom_call.1} parent=1 // loop_header_branch
      %18 = sbr.rel (%p16) target = $region8
    $region5: #{tpu_custom_call.1} parent=1 // loop_body
      %s20 = ssub.s32 %s15, 1
      %s21 = ssub.s32 %s15, 2
      %s22 = sadd.s32 %s15, 1
      %s24 = sadd.s32 %s23, 1
      %p27 = scmp.eq.s32.totalorder %s15, 1
      %p28 = scmp.ne.s32.totalorder %s23, %s25
      %p29 = scmp.eq.s32.totalorder %s15, 0
      %p30 = por %p28, %p29
      %p31 = scmp.ne.s32.totalorder %s23, %s25
      %p32 = scmp.eq.s32.totalorder %s20, 1
      %p33 = por %p31, %p32
      %p34 = scmp.ne.s32.totalorder %s25, %s26
      %p35 = scmp.eq.s32.totalorder %s20, 0
      %p36 = por %p34, %p35
      %p37 = scmp.ne.s32.totalorder %s25, %s26
      %p38 = scmp.eq.s32.totalorder %s21, 1
      %p39 = por %p37, %p38
      %p41 = scmp.ne.s32.totalorder %s26, %s40
      %p42 = scmp.eq.s32.totalorder %s21, 0
      %p43 = por %p41, %p42
      %s44 = ssub.s32 %s15, %s22
      %p45 = scmp.eq.s32.totalorder %s44, 0
      %s47 = sadd.s32 %s46, 1
      %s48 = scalar_select %p45, %s46, %s47
      %p51 = pneg %p45
      %p52 = scmp.eq.s32.totalorder %s15, 1
      %p53 = por %p51, %p52
      %p54 = scmp.ne.s32.totalorder %s46, %s49
      %p55 = scmp.eq.s32.totalorder %s15, 0
      %p56 = por %p54, %p55
      %p57 = scmp.ne.s32.totalorder %s46, %s49
      %p58 = scmp.eq.s32.totalorder %s20, 1
      %p59 = por %p57, %p58
      %p60 = scmp.ne.s32.totalorder %s49, %s50
      %p61 = scmp.eq.s32.totalorder %s20, 0
      %p62 = por %p60, %p61
      %p63 = scmp.ne.s32.totalorder %s49, %s50
      %p64 = scmp.eq.s32.totalorder %s21, 1
      %p65 = por %p63, %p64
      %p67 = scmp.ne.s32.totalorder %s50, %s66
      %p68 = scmp.eq.s32.totalorder %s21, 0
      %p69 = por %p67, %p68
      %s70 = ssub.s32 %s15, %s22
      %p71 = scmp.eq.s32.totalorder %s70, 0
      %s73 = sadd.s32 %s72, 1
      %s74 = scalar_select %p71, %s72, %s73
      %p77 = pneg %p71
      %p78 = scmp.eq.s32.totalorder %s15, 1
      %p79 = por %p77, %p78
      %p80 = scmp.ne.s32.totalorder %s72, %s75
      %p81 = scmp.eq.s32.totalorder %s15, 0
      %p82 = por %p80, %p81
      %p83 = scmp.ne.s32.totalorder %s72, %s75
      %p84 = scmp.eq.s32.totalorder %s20, 1
      %p85 = por %p83, %p84
      %p86 = scmp.ne.s32.totalorder %s75, %s76
      %p87 = scmp.eq.s32.totalorder %s20, 0
      %p88 = por %p86, %p87
      %p89 = scmp.ne.s32.totalorder %s75, %s76
      %p90 = scmp.eq.s32.totalorder %s21, 1
      %p91 = por %p89, %p90
      %p93 = scmp.ne.s32.totalorder %s76, %s92
      %p94 = scmp.eq.s32.totalorder %s21, 0
      %p95 = por %p93, %p94
      %p96 = scmp.le.s32.totalorder 1, %s15
      %p97 = scmp.lt.s32.totalorder %s15, 3
      %p98 = pnand %p96, %p97
      %p99 = pneg %p98
      // Predicated region
      $region9: #{tpu_custom_call.1} parent=5 // pred_check
        _
      $region10: #{tpu_custom_call.1} parent=5 // pred_check_branch
        %101 = sbr.rel (%p98) target = $region12
      $region11: #{tpu_custom_call.1} parent=5 // pred_region
        %s102 = ssub.s32 %s15, 1
        // Predicated region
        $region13: #{tpu_custom_call.1} parent=11 // pred_check
          %p103 = pneg %p36
        $region14: #{tpu_custom_call.1} parent=11 // pred_check_branch
          %105 = sbr.rel (%p103) target = $region16
        $region15: #{tpu_custom_call.1} parent=11 // pred_region
          %s107 = ssub.s32 16, 16
          %108 = vsyncadd [#allocation5], %s107
          %111 = dma.hbm_to_smem %s0, 16, [#allocation2], [#allocation5]
        $region16: #{tpu_custom_call.1} parent=11 // pred_fallthru
          _
      $region12: #{tpu_custom_call.1} parent=5 // pred_fallthru
        _
      %p112 = scmp.lt.s32.totalorder %s15, 2
      // Predicated region
      $region17: #{tpu_custom_call.1} parent=5 // pred_check
        %p113 = pneg %p112
      $region18: #{tpu_custom_call.1} parent=5 // pred_check_branch
        %115 = sbr.rel (%p113) target = $region20
      $region19: #{tpu_custom_call.1} parent=5 // pred_region
        // Predicated region
        $region21: #{tpu_custom_call.1} parent=19 // pred_check
          %p116 = pneg %p56
        $region22: #{tpu_custom_call.1} parent=19 // pred_check_branch
          %118 = sbr.rel (%p116) target = $region24
        $region23: #{tpu_custom_call.1} parent=19 // pred_region
          %s119 = sand.u32 %s46, 1
          %s120 = scalar_lea.sflag [#allocation3], %s119
          %s121 = sand.u32 %s46, 1
          %s122 = smul.addr %s121, 16
          %s123 = scalar_lea.vmem [#allocation6], %s122
          %s125 = ssub.s32 256, 256
          %126 = vsyncadd %s120, %s125
          %s127 = smul.addr %s15, 2
          %s128 = smul.addr %s127, 128
          %s129 = scalar_lea.hbm %s1, %s128
          %s131 = sshll.u32 %s123, 4
          %s132 = int_to_ptr.vmem [resolvable:$true] %s131
          %134 = dma.hbm_to_vmem [thread:$0]  %s129, 256, %s132, %s120
        $region24: #{tpu_custom_call.1} parent=19 // pred_fallthru
          _
      $region20: #{tpu_custom_call.1} parent=5 // pred_fallthru
        _
      %p135 = scmp.le.s32.totalorder 1, %s15
      %p136 = scmp.lt.s32.totalorder %s15, 3
      %p137 = pnand %p135, %p136
      %p138 = pneg %p137
      // Predicated region
      $region25: #{tpu_custom_call.1} parent=5 // pred_check
        _
      $region26: #{tpu_custom_call.1} parent=5 // pred_check_branch
        %140 = sbr.rel (%p137) target = $region28
      $region27: #{tpu_custom_call.1} parent=5 // pred_region
        %s141 = ssub.s32 %s15, 1
        // Predicated region
        $region29: #{tpu_custom_call.1} parent=27 // pred_check
          %p142 = pneg %p36
        $region30: #{tpu_custom_call.1} parent=27 // pred_check_branch
          %144 = sbr.rel (%p142) target = $region32
        $region31: #{tpu_custom_call.1} parent=27 // pred_region
          %145 = dma.done [#allocation5], 16
        $region32: #{tpu_custom_call.1} parent=27 // pred_fallthru
          _
        %s146 = sand.u32 %s49, 1
        %s147 = scalar_lea.sflag [#allocation3], %s146
        %s148 = sand.u32 %s49, 1
        %s149 = smul.addr %s148, 16
        %s150 = scalar_lea.vmem [#allocation6], %s149
        // Predicated region
        $region33: #{tpu_custom_call.1} parent=27 // pred_check
          %p151 = pneg %p62
        $region34: #{tpu_custom_call.1} parent=27 // pred_check_branch
          %153 = sbr.rel (%p151) target = $region36
        $region35: #{tpu_custom_call.1} parent=27 // pred_region
          %154 = dma.done %s147, 256
        $region36: #{tpu_custom_call.1} parent=27 // pred_fallthru
          _
        %155 = sfence
        %p156 = pneg %p36
        %p157 = pneg %p33
        %s158 = sand.u32 %s49, 1
        %s159 = scalar_lea.sflag [#allocation3], %s158
        %s160 = sand.u32 %s49, 1
        %s161 = smul.addr %s160, 16
        %s162 = scalar_lea.vmem [#allocation6], %s161
        %p163 = pneg %p62
        %p164 = pneg %p59
        %p165 = pneg %p88
        %p166 = pneg %p85
        %s167 = sand.u32 %s75, 1
        %s168 = scalar_lea.sflag [#allocation4], %s167
        %s169 = sand.u32 %s75, 1
        %s170 = smul.addr %s169, 16
        %s171 = scalar_lea.vmem [#allocation7], %s170
        %v172 = vld [vmem:[%s150] sm:$0xff]
        %v173 = vld [vmem:[%s150 + $0x8] sm:$0xff]
        %v174 = vadd.f32 %v172, %v173
        %175 = vadd.xlane.f32.xlu0 %v174
        %v176 = vpop.xlane.xlu0 %175
        %v177 = vmul.f32 %v176, 0.00390625
        %v179 = vrot.slane %v177, 6
        %vm181 = vcmask 1041408
        %v182 = vsel %vm181, 0.0, %v179
        %v183 = vsel %vm181, %v179, 0.0
        %s184 = sld [smem:[#allocation2]]
        %v185 = vstv %s184
        %v186 = vmul.f32 %v185, %v182
        %s187 = sld [smem:[#allocation2 + $0x1]]
        %v188 = vstv %s187
        %v189 = vmul.f32 %v188, %v182
        %v190 = vmul.f32 %v188, %v183
        %vm193 = vcmask 1045504
        %v194 = vrot.slane %v189, 2
        %v195 = vrot.slane %v190, 2
        %v196 = vsel %vm193, %v194, %v195
        %v198 = vadd.f32 %v186, %v196
        %s199 = sld [smem:[#allocation2 + $0x2]]
        %v200 = vstv %s199
        %v201 = vmul.f32 %v200, %v182
        %v202 = vmul.f32 %v200, %v183
        %vm205 = vcmask 1043456
        %v206 = vrot.slane %v201, 4
        %v207 = vrot.slane %v202, 4
        %v208 = vsel %vm205, %v206, %v207
        %v210 = vadd.f32 %v198, %v208
        %v211 = vxor.u32 %v210, 2147483648
        %v212 = vmul.f32 %v211, 1.442695
        %v213 = vpow.pop %v212
        %v214 = vadd.f32 %v213, 1.0
        %v215 = vrcp.pop %v214
        %v216 = vmul.f32 1.0, %v215
        %218 = vset.pattern.permute.xlu0 0
        %219 = vperm.xlu0 %218, %v216
        %v220 = vpop.permute.xlu0 %219
        %v222 = vmul.f32 %v172, %v220
        %v223 = vmul.f32 %v173, %v220
        %224 = vst [vmem:[%s171] sm:$0xff] %v222
        %225 = vst [vmem:[%s171 + $0x8] sm:$0xff] %v223
        %s226 = sand.u32 %s75, 1
        %s227 = scalar_lea.sflag [#allocation4], %s226
        %s228 = sand.u32 %s75, 1
        %s229 = smul.addr %s228, 16
        %s230 = scalar_lea.vmem [#allocation7], %s229
        // Predicated region
        $region37: #{tpu_custom_call.1} parent=27 // pred_check
          %p231 = pneg %p85
        $region38: #{tpu_custom_call.1} parent=27 // pred_check_branch
          %233 = sbr.rel (%p231) target = $region40
        $region39: #{tpu_custom_call.1} parent=27 // pred_region
          %s235 = ssub.s32 256, 256
          %236 = vsyncadd %s227, %s235
          %s237 = smul.addr %s20, 2
          %s238 = smul.addr %s237, 128
          %s239 = scalar_lea.hbm %s2, %s238
          %s241 = sshll.u32 %s230, 4
          %s242 = int_to_ptr.vmem [resolvable:$true] %s241
          %244 = dma.vmem_to_hbm [thread:$0]  %s242, 256, %s239, %s227
        $region40: #{tpu_custom_call.1} parent=27 // pred_fallthru
          _
      $region28: #{tpu_custom_call.1} parent=5 // pred_fallthru
        _
      %p245 = scmp.le.s32.totalorder 2, %s15
      // Predicated region
      $region41: #{tpu_custom_call.1} parent=5 // pred_check
        %p246 = pneg %p245
      $region42: #{tpu_custom_call.1} parent=5 // pred_check_branch
        %248 = sbr.rel (%p246) target = $region44
      $region43: #{tpu_custom_call.1} parent=5 // pred_region
        %s249 = ssub.s32 %s15, 2
        // Predicated region
        $region45: #{tpu_custom_call.1} parent=43 // pred_check
          %p250 = pneg %p91
        $region46: #{tpu_custom_call.1} parent=43 // pred_check_branch
          %252 = sbr.rel (%p250) target = $region48
        $region47: #{tpu_custom_call.1} parent=43 // pred_region
          %s253 = sand.u32 %s76, 1
          %s254 = scalar_lea.sflag [#allocation4], %s253
          %s255 = sand.u32 %s76, 1
          %s256 = smul.addr %s255, 16
          %s257 = scalar_lea.vmem [#allocation7], %s256
          %258 = dma.done %s254, 256
        $region48: #{tpu_custom_call.1} parent=43 // pred_fallthru
          _
      $region44: #{tpu_custom_call.1} parent=5 // pred_fallthru
        _
    $region6: #{tpu_custom_call.1} parent=1 // loop_footer
      %s19 = sadd.s32 1, %s15
    $region7: #{tpu_custom_call.1} parent=1 // loop_footer_branch
      %14 = sbr.rel target = $region3
    $region8: #{tpu_custom_call.1} parent=1 // loop_exit
      _
    %259 = vsyncpa [#allocation3], 1
    %s260 = scalar_lea.sflag [#allocation3], 1
    %261 = vsyncpa %s260, 1
    %262 = vsyncpa [#allocation4], 1
    %s263 = scalar_lea.sflag [#allocation4], 1
    %264 = vsyncpa %s263, 1
    %265 = vsyncpa [#allocation5], 1
    %s266 = scalar_lea.sflag [#allocation5], 1
    %267 = vsyncpa %s266, 1

</llo_original>
